<compile_context>
chip_gen: v7x
topology: tpu7x:2x2x1
jax: 0.10.0
libtpu: 0.0.40
codegen_flags: <defaults>
</compile_context>

<pallas_src>
import jax
import jax.numpy as jnp
from jax import lax
from jax.experimental import pallas as pl
from jax.experimental.pallas import tpu as pltpu


def _row_tile(n, preferred=(256, 128, 64, 32, 16, 8)):
    """Largest sublane-aligned row tile that evenly divides n (else the full dim)."""
    for t in preferred:
        if n % t == 0:
            return t
    return n


def _qkt(q, k):
    # q (TM, D) @ k (Lk, D)^T -> (TM, Lk), contracting on D without an explicit transpose.
    return lax.dot_general(
        q, k,
        dimension_numbers=(((1,), (1,)), ((), ())),
        preferred_element_type=jnp.float32,
        precision=lax.Precision.HIGHEST,
    )


def _softmax_rows(s):
    s_max = jnp.max(s, axis=-1, keepdims=True)
    p = jnp.exp(s - s_max)
    return p / jnp.sum(p, axis=-1, keepdims=True)


def _sdpa_kernel(q_ref, k_ref, v_ref, out_ref, score_ref):
    # q_ref (TM, D), k_ref (Lk, D), v_ref (Lk, Dv)
    s = _qkt(q_ref[...], k_ref[...])
    attn = _softmax_rows(s)
    score_ref[...] = attn.astype(score_ref.dtype)
    out_ref[...] = jnp.dot(
        attn.astype(v_ref.dtype), v_ref[...],
        preferred_element_type=jnp.float32,
        precision=lax.Precision.HIGHEST,
    ).astype(out_ref.dtype)


def _sdpa_mask_kernel(q_ref, k_ref, v_ref, m_ref, out_ref, score_ref):
    s = _qkt(q_ref[...], k_ref[...])
    s = jnp.where(m_ref[...] == 0, jnp.float32(-10000.0), s)
    attn = _softmax_rows(s)
    score_ref[...] = attn.astype(score_ref.dtype)
    out_ref[...] = jnp.dot(
        attn.astype(v_ref.dtype), v_ref[...],
        preferred_element_type=jnp.float32,
        precision=lax.Precision.HIGHEST,
    ).astype(out_ref.dtype)


def scale_dot_product_attention(q, k, v, mask=None):
    """Pallas ScaleDotProductAttention forward.

    q:    (Lq, D)
    k:    (Lk, D)
    v:    (Lk, Dv)
    mask: (Lq, Lk) or broadcastable, 0 => masked position (optional)
    returns (out (Lq, Dv), score (Lq, Lk))
    """
    Lq, D = q.shape
    Lk, Dk = k.shape
    assert Dk == D, "q/k feature dims must match"
    Lk_v, Dv = v.shape
    assert Lk_v == Lk, "k/v lengths must match"

    tm = _row_tile(Lq)
    grid = (Lq // tm,)

    in_specs = [
        pl.BlockSpec((tm, D), lambda i: (i, 0)),   # q row tile
        pl.BlockSpec((Lk, D), lambda i: (0, 0)),   # k resident across row tiles
        pl.BlockSpec((Lk, Dv), lambda i: (0, 0)),  # v resident across row tiles
    ]
    inputs = [q, k, v]

    itemsize = q.dtype.itemsize
    bytes_accessed = (Lq * D + Lk * D + Lk * Dv + Lq * Dv + Lq * Lk) * itemsize

    if mask is not None:
        mask_i = jnp.broadcast_to(mask, (Lq, Lk)).astype(jnp.int32)
        in_specs.append(pl.BlockSpec((tm, Lk), lambda i: (i, 0)))
        inputs.append(mask_i)
        bytes_accessed += Lq * Lk * 4
        kernel = _sdpa_mask_kernel
    else:
        kernel = _sdpa_kernel

    out_shape = (
        jax.ShapeDtypeStruct((Lq, Dv), q.dtype),     # out
        jax.ShapeDtypeStruct((Lq, Lk), q.dtype),     # score (full softmax matrix)
    )
    out_specs = (
        pl.BlockSpec((tm, Dv), lambda i: (i, 0)),
        pl.BlockSpec((tm, Lk), lambda i: (i, 0)),
    )

    grid_spec = pltpu.PrefetchScalarGridSpec(
        num_scalar_prefetch=0,
        grid=grid,
        in_specs=in_specs,
        out_specs=out_specs,
    )

    cost = pl.CostEstimate(
        flops=2 * Lq * Lk * D + 2 * Lq * Lk * Dv,
        transcendentals=Lq * Lk,
        bytes_accessed=bytes_accessed,
    )

    out, score = pl.pallas_call(
        kernel,
        out_shape=out_shape,
        grid_spec=grid_spec,
        compiler_params=pltpu.CompilerParams(
            dimension_semantics=("parallel",),
        ),
        cost_estimate=cost,
    )(*inputs)
    return out, score


def _reference(q, k, v, mask=None):
    score = jnp.matmul(q, k.T, precision=lax.Precision.HIGHEST)
    if mask is not None:
        score = jnp.where(mask == 0, jnp.float32(-10000.0), score)
    score = jax.nn.softmax(score, axis=-1)
    out = jnp.matmul(score, v, precision=lax.Precision.HIGHEST)
    return out, score


if __name__ == "__main__":
    key = jax.random.PRNGKey(0)
    kq, kk, kv, km = jax.random.split(key, 4)

    def _check(Lq, Lk, D, Dv, use_mask):
        q = jax.random.normal(kq, (Lq, D), dtype=jnp.float32)
        k = jax.random.normal(kk, (Lk, D), dtype=jnp.float32)
        v = jax.random.normal(kv, (Lk, Dv), dtype=jnp.float32)
        mask = None
        if use_mask:
            mask = (jax.random.uniform(km, (Lq, Lk)) > 0.3).astype(jnp.int32)
            d = jnp.arange(min(Lq, Lk))
            mask = mask.at[d, d].set(1)  # guarantee >=1 attendable key per row

        out, score = scale_dot_product_attention(q, k, v, mask)
        out = jax.block_until_ready(out)
        score = jax.block_until_ready(score)

        ref_out, ref_score = _reference(q, k, v, mask)
        assert out.shape == (Lq, Dv) and score.shape == (Lq, Lk)
        assert jnp.allclose(score, ref_score, atol=1e-3, rtol=1e-3), "score mismatch"
        assert jnp.allclose(out, ref_out, atol=1e-3, rtol=1e-3), "output mismatch"

    # Small shapes implied by the module: k is (length, d_tensor) = (8, 32).
    _check(Lq=8, Lk=8, D=32, Dv=32, use_mask=False)
    _check(Lq=8, Lk=8, D=32, Dv=32, use_mask=True)
    # Larger case that exercises the query-row tiling (grid of 2 row tiles, resident K/V).
    _check(Lq=256, Lk=256, D=64, Dv=64, use_mask=False)
    _check(Lq=256, Lk=256, D=64, Dv=64, use_mask=True)

    print("KERNEL_OK")
</pallas_src>

<mosaic_0001>
module attributes {stable_mosaic.version = 11 : i64} {
  func.func @_sdpa_kernel(%arg0: i32, %arg1: memref<8x32xf32, #tpu.memory_space<vmem>>, %arg2: memref<8x32xf32, #tpu.memory_space<vmem>>, %arg3: memref<8x32xf32, #tpu.memory_space<vmem>>, %arg4: memref<8x32xf32, #tpu.memory_space<vmem>>, %arg5: memref<8x8xf32, #tpu.memory_space<vmem>>) attributes {dimension_semantics = [#tpu.dimension_semantics<parallel>], iteration_bounds = array<i64: 1>, scalar_prefetch = 0 : i64, scratch_operands = 0 : i64, tpu.core_type = #tpu.core_type<tc>, window_params = [{transform_indices = @transform_0, window_bounds = array<i64: 8, 32>}, {pipeline_mode = #tpu.pipeline_mode<synchronous>, transform_indices = @transform_1, window_bounds = array<i64: 8, 32>}, {pipeline_mode = #tpu.pipeline_mode<synchronous>, transform_indices = @transform_2, window_bounds = array<i64: 8, 32>}, {transform_indices = @transform_3, window_bounds = array<i64: 8, 32>}, {transform_indices = @transform_4, window_bounds = array<i64: 8, 8>}]} {
    %c0 = arith.constant 0 : index
    %c0_0 = arith.constant 0 : index
    %0 = vector.load %arg1[%c0, %c0_0] : memref<8x32xf32, #tpu.memory_space<vmem>>, vector<8x32xf32>
    %c0_1 = arith.constant 0 : index
    %c0_2 = arith.constant 0 : index
    %1 = vector.load %arg2[%c0_1, %c0_2] : memref<8x32xf32, #tpu.memory_space<vmem>>, vector<8x32xf32>
    %cst = arith.constant dense<0.000000e+00> : vector<8x8xf32>
    %2 = tpu.matmul %0, %1, %cst {dimension_numbers = #tpu.dot_dimension_numbers<[1], [1], [0], [0], [0, 0, 1, 0], [], []>, precision = #tpu.contract_precision<fp32>} : vector<8x32xf32>, vector<8x32xf32>, vector<8x8xf32> -> vector<8x8xf32>
    %cst_3 = arith.constant dense<0xFF800000> : vector<8xf32>
    %3 = vector.multi_reduction <maximumf>, %2, %cst_3 [1] : vector<8x8xf32> to vector<8xf32>
    %4 = vector.shape_cast %3 : vector<8xf32> to vector<8x1xf32>
    %5 = vector.broadcast %4 : vector<8x1xf32> to vector<8x8xf32>
    %6 = arith.subf %2, %5 : vector<8x8xf32>
    %7 = math.exp %6 : vector<8x8xf32>
    %cst_4 = arith.constant dense<0.000000e+00> : vector<8xf32>
    %8 = vector.multi_reduction <add>, %7, %cst_4 [1] : vector<8x8xf32> to vector<8xf32>
    %9 = vector.shape_cast %8 : vector<8xf32> to vector<8x1xf32>
    %10 = vector.broadcast %9 : vector<8x1xf32> to vector<8x8xf32>
    %11 = arith.divf %7, %10 : vector<8x8xf32>
    %c0_5 = arith.constant 0 : index
    %c0_6 = arith.constant 0 : index
    %12 = vector.load %arg5[%c0_5, %c0_6] : memref<8x8xf32, #tpu.memory_space<vmem>>, vector<8x8xf32>
    tpu.vector_store %arg5[%c0_5, %c0_6], %11 {strides = array<i32>} : memref<8x8xf32, #tpu.memory_space<vmem>>, vector<8x8xf32>,
    %c0_7 = arith.constant 0 : index
    %c0_8 = arith.constant 0 : index
    %13 = vector.load %arg3[%c0_7, %c0_8] : memref<8x32xf32, #tpu.memory_space<vmem>>, vector<8x32xf32>
    %cst_9 = arith.constant dense<0.000000e+00> : vector<8x32xf32>
    %14 = tpu.matmul %11, %13, %cst_9 {dimension_numbers = #tpu.dot_dimension_numbers<[1], [0], [0], [1], [0, 0, 1, 1], [], []>, precision = #tpu.contract_precision<fp32>} : vector<8x8xf32>, vector<8x32xf32>, vector<8x32xf32> -> vector<8x32xf32>
    %c0_10 = arith.constant 0 : index
    %c0_11 = arith.constant 0 : index
    %15 = vector.load %arg4[%c0_10, %c0_11] : memref<8x32xf32, #tpu.memory_space<vmem>>, vector<8x32xf32>
    tpu.vector_store %arg4[%c0_10, %c0_11], %14 {strides = array<i32>} : memref<8x32xf32, #tpu.memory_space<vmem>>, vector<8x32xf32>,
    return
  }
  func.func @transform_0(%arg0: i32) -> (i32, i32) {
    %c0_i32 = arith.constant 0 : i32
    %c0_i32_0 = arith.constant 0 : i32
    return %arg0, %c0_i32 : i32, i32
  }
  func.func @transform_1(%arg0: i32) -> (i32, i32) {
    %c0_i32 = arith.constant 0 : i32
    %c0_i32_0 = arith.constant 0 : i32
    %c0_i32_1 = arith.constant 0 : i32
    return %c0_i32, %c0_i32_0 : i32, i32
  }
  func.func @transform_2(%arg0: i32) -> (i32, i32) {
    %c0_i32 = arith.constant 0 : i32
    %c0_i32_0 = arith.constant 0 : i32
    %c0_i32_1 = arith.constant 0 : i32
    return %c0_i32, %c0_i32_0 : i32, i32
  }
  func.func @transform_3(%arg0: i32) -> (i32, i32) {
    %c0_i32 = arith.constant 0 : i32
    %c0_i32_0 = arith.constant 0 : i32
    return %arg0, %c0_i32 : i32, i32
  }
  func.func @transform_4(%arg0: i32) -> (i32, i32) {
    %c0_i32 = arith.constant 0 : i32
    %c0_i32_0 = arith.constant 0 : i32
    return %arg0, %c0_i32 : i32, i32
  }
}

</mosaic_0001>

<llo_original>
// kernel: tpu_custom_call.1
$region0: #{tpu_custom_call.1}
  #allocation0 [shape = 'u32[]', space=smem, size = 0x4, offset = 0x4, fixed_abs, tag = 'smem constant byte address 0x4 - core index']
  #allocation1 [shape = 'u32[144,128]{1,0:T(1,128)}', space=vmem, size = 0x12000, scoped, tag = 'internal scratch']
  %s0 = inlined_call_operand.hbm [shape: f32[8,32], index: 0, kind: input, shape index: {}]
  %s1 = inlined_call_operand.hbm [shape: f32[8,32], index: 1, kind: input, shape index: {}]
  %s2 = inlined_call_operand.hbm [shape: f32[8,32], index: 2, kind: input, shape index: {}]
  %s3 = inlined_call_operand.hbm [shape: f32[8,32], index: 3, kind: output, shape index: {0}]
  %s4 = inlined_call_operand.hbm [shape: f32[8,8], index: 4, kind: output, shape index: {1}]
  %5 = xla_tuple %s3, %s4
  %s6 = sld [smem:[#allocation0]]
  $region42: #{tpu_custom_call.1} parent=0
    _
  %s8 = ssub.s32 1, %s6
  %s9 = scalar_select 0, %s8, %s6
  $region1: #{tpu_custom_call.1} parent=0
    #allocation2 [shape = 'u8[4096]{0}', space=vmem, size = 0x1000, scoped, tag = 'input window, operand 0, single buffered']
    #allocation3 [shape = 's32[1]{0}', space=sflag, size = 0x4, scoped, tag = 'scoped memory for tpu_custom_call.1']
    #allocation4 [shape = 's32[1]{0}', space=sflag, size = 0x4, scoped, tag = 'scoped memory for tpu_custom_call.1']
    #allocation5 [shape = 'u8[4096]{0}', space=vmem, size = 0x1000, scoped, tag = 'input window, operand 1, single buffered']
    #allocation6 [shape = 's32[1]{0}', space=sflag, size = 0x4, scoped, tag = 'scoped memory for tpu_custom_call.1']
    #allocation7 [shape = 'u8[4096]{0}', space=vmem, size = 0x1000, scoped, tag = 'input window, operand 2, single buffered']
    #allocation8 [shape = 'u8[4096]{0}', space=vmem, size = 0x1000, scoped, tag = 'output window, operand 0, single buffered']
    #allocation9 [shape = 'u8[4096]{0}', space=vmem, size = 0x1000, scoped, tag = 'output window, operand 1, single buffered']
    #allocation10 [shape = 's32[1]{0}', space=sflag, size = 0x4, scoped, tag = 'scoped memory for tpu_custom_call.1']
    %10 = vsyncpa [#allocation3], 0
    %11 = vsyncpa [#allocation6], 0
    %12 = vsyncpa [#allocation4], 0
    %13 = vsyncpa [#allocation10], 0
    // Predicated region
    $region2: #{tpu_custom_call.1} parent=1 // pred_check
      _
    $region3: #{tpu_custom_call.1} parent=1 // pred_check_branch
      %15 = sbr.rel (0) target = $region5
    $region4: #{tpu_custom_call.1} parent=1 // pred_region
      %s17 = ssub.s32 128, 128
      %18 = vsyncadd [#allocation3], %s17
      %s20 = sshll.u32 [#allocation2], 4
      %s21 = int_to_ptr.vmem [resolvable:$true] %s20
      %23 = dma.hbm_to_vmem [thread:$0]  %s0, 128, %s21, [#allocation3]
    $region5: #{tpu_custom_call.1} parent=1 // pred_fallthru
      _
    // Predicated region
    $region6: #{tpu_custom_call.1} parent=1 // pred_check
      _
    $region7: #{tpu_custom_call.1} parent=1 // pred_check_branch
      %25 = sbr.rel (0) target = $region9
    $region8: #{tpu_custom_call.1} parent=1 // pred_region
      %s27 = ssub.s32 128, 128
      %28 = vsyncadd [#allocation6], %s27
      %s30 = sshll.u32 [#allocation5], 4
      %s31 = int_to_ptr.vmem [resolvable:$true] %s30
      %33 = dma.hbm_to_vmem [thread:$0]  %s1, 128, %s31, [#allocation6]
    $region9: #{tpu_custom_call.1} parent=1 // pred_fallthru
      _
    // Predicated region
    $region10: #{tpu_custom_call.1} parent=1 // pred_check
      _
    $region11: #{tpu_custom_call.1} parent=1 // pred_check_branch
      %35 = sbr.rel (0) target = $region13
    $region12: #{tpu_custom_call.1} parent=1 // pred_region
      %s37 = ssub.s32 128, 128
      %38 = vsyncadd [#allocation6], %s37
      %s40 = sshll.u32 [#allocation7], 4
      %s41 = int_to_ptr.vmem [resolvable:$true] %s40
      %43 = dma.hbm_to_vmem [thread:$0]  %s2, 128, %s41, [#allocation6]
    $region13: #{tpu_custom_call.1} parent=1 // pred_fallthru
      _
    // Predicated region
    $region14: #{tpu_custom_call.1} parent=1 // pred_check
      _
    $region15: #{tpu_custom_call.1} parent=1 // pred_check_branch
      %45 = sbr.rel (0) target = $region17
    $region16: #{tpu_custom_call.1} parent=1 // pred_region
      %46 = dma.done [#allocation3], 128
    $region17: #{tpu_custom_call.1} parent=1 // pred_fallthru
      _
    // Predicated region
    $region18: #{tpu_custom_call.1} parent=1 // pred_check
      _
    $region19: #{tpu_custom_call.1} parent=1 // pred_check_branch
      %48 = sbr.rel (0) target = $region21
    $region20: #{tpu_custom_call.1} parent=1 // pred_region
      %49 = dma.done [#allocation6], 128
    $region21: #{tpu_custom_call.1} parent=1 // pred_fallthru
      _
    // Predicated region
    $region22: #{tpu_custom_call.1} parent=1 // pred_check
      _
    $region23: #{tpu_custom_call.1} parent=1 // pred_check_branch
      %51 = sbr.rel (0) target = $region25
    $region24: #{tpu_custom_call.1} parent=1 // pred_region
      %52 = dma.done [#allocation6], 128
    $region25: #{tpu_custom_call.1} parent=1 // pred_fallthru
      _
    %v53 = vld [vmem:[#allocation2] sm:$0xff]
    %v54 = vld [vmem:[#allocation5] sm:$0xff]
    %vm55 = vcmask 261120
    %v57 = vsel %vm55, %v53, 0
    %v60 = vsel %vm55, %v54, 0
    %62 = vmatprep.subr.mxu0 0.0
    %v63 = vand.u32 %v60, 4294901760
    %64 = vmatpush1.xpose.msra.mxu0 %v63
    %65 = vmatprep.subr.mxu0 0.0
    %66 = vmatpush1.xpose.msra.mxu0 0.0
    %67 = vmatprep.subr.mxu0 0.0
    %68 = vmatpush1.xpose.msra.mxu0 0.0
    %69 = vmatprep.subr.mxu0 0.0
    %70 = vmatpush1.xpose.msra.mxu0 0.0
    %71 = vmatprep.subr.mxu0 0.0
    %72 = vmatpush1.xpose.msra.mxu0 0.0
    %73 = vmatprep.subr.mxu0 0.0
    %74 = vmatpush1.xpose.msra.mxu0 0.0
    %75 = vmatprep.subr.mxu0 0.0
    %76 = vmatpush1.xpose.msra.mxu0 0.0
    %77 = vmatprep.subr.mxu0 0.0
    %78 = vmatpush1.xpose.msra.mxu0 0.0
    %79 = vmatprep.subr.mxu0 0.0
    %80 = vmatpush1.xpose.msra.mxu0 0.0
    %81 = vmatprep.subr.mxu0 0.0
    %82 = vmatpush1.xpose.msra.mxu0 0.0
    %83 = vmatprep.subr.mxu0 0.0
    %84 = vmatpush1.xpose.msra.mxu0 0.0
    %85 = vmatprep.subr.mxu0 0.0
    %86 = vmatpush1.xpose.msra.mxu0 0.0
    %87 = vmatprep.subr.mxu0 0.0
    %88 = vmatpush1.xpose.msra.mxu0 0.0
    %89 = vmatprep.subr.mxu0 0.0
    %90 = vmatpush1.xpose.msra.mxu0 0.0
    %91 = vmatprep.subr.mxu0 0.0
    %92 = vmatpush1.xpose.msra.mxu0 0.0
    %93 = vmatprep.subr.mxu0 0.0
    %94 = vmatpush1.xpose.msra.mxu0 0.0
    %95 = vmatprep.subr.mxu0 0.0
    %96 = vmatpush1.xpose.msra.mxu0 0.0
    %97 = vmatprep.subr.mxu0 0.0
    %98 = vmatpush1.xpose.msra.mxu0 0.0
    %99 = vmatprep.subr.mxu0 0.0
    %100 = vmatpush1.xpose.msra.mxu0 0.0
    %101 = vmatprep.subr.mxu0 0.0
    %102 = vmatpush1.xpose.msra.mxu0 0.0
    %103 = vmatprep.subr.mxu0 0.0
    %104 = vmatpush1.xpose.msra.mxu0 0.0
    %105 = vmatprep.subr.mxu0 0.0
    %106 = vmatpush1.xpose.msra.mxu0 0.0
    %107 = vmatprep.subr.mxu0 0.0
    %108 = vmatpush1.xpose.msra.mxu0 0.0
    %109 = vmatprep.subr.mxu0 0.0
    %110 = vmatpush1.xpose.msra.mxu0 0.0
    %111 = vmatprep.subr.mxu0 0.0
    %112 = vmatpush1.xpose.msra.mxu0 0.0
    %113 = vmatprep.subr.mxu0 0.0
    %114 = vmatpush1.xpose.msra.mxu0 0.0
    %115 = vmatprep.subr.mxu0 0.0
    %116 = vmatpush1.xpose.msra.mxu0 0.0
    %117 = vmatprep.subr.mxu0 0.0
    %118 = vmatpush1.xpose.msra.mxu0 0.0
    %119 = vmatprep.subr.mxu0 0.0
    %120 = vmatpush1.xpose.msra.mxu0 0.0
    %121 = vmatprep.subr.mxu0 0.0
    %122 = vmatpush1.xpose.msra.mxu0 0.0
    %123 = vmatprep.subr.mxu0 0.0
    %124 = vmatpush1.xpose.msra.mxu0 0.0
    %125 = vmatprep.subr.mxu0 0.0
    %126 = vmatpush1.xpose.msra.mxu0 0.0
    %127 = vmatprep.mubr.f32.mxu0 0.0
    %v128 = vand.u32 %v57, 4294901760
    %v129 = vsub.f32 %v57, %v128
    %v130 = vand.u32 %v129, 4294901760
    %v131 = vsub.f32 %v129, %v130
    %v132 = vand.u32 %v131, 4294901760
    %133 = vmatmul.mubr.f32.gmra.mrb[0].mxu0 %v132
    %v134 = vpop.f32.mrb[0].mxu0
    %v135 = vadd.f32 0.0, %v134
    %v136 = vpop.f32.mrb[0].mxu0
    %137 = vdwg.mxu0
    %138 = vmatprep.subr.mxu0 0.0
    %v139 = vand.u32 %v60, 4294901760
    %v140 = vsub.f32 %v60, %v139
    %v141 = vand.u32 %v140, 4294901760
    %v142 = vsub.f32 %v140, %v141
    %v143 = vand.u32 %v142, 4294901760
    %144 = vmatpush1.xpose.msra.mxu0 %v143
    %145 = vmatprep.subr.mxu0 0.0
    %146 = vmatpush1.xpose.msra.mxu0 0.0
    %147 = vmatprep.subr.mxu0 0.0
    %148 = vmatpush1.xpose.msra.mxu0 0.0
    %149 = vmatprep.subr.mxu0 0.0
    %150 = vmatpush1.xpose.msra.mxu0 0.0
    %151 = vmatprep.subr.mxu0 0.0
    %152 = vmatpush1.xpose.msra.mxu0 0.0
    %153 = vmatprep.subr.mxu0 0.0
    %154 = vmatpush1.xpose.msra.mxu0 0.0
    %155 = vmatprep.subr.mxu0 0.0
    %156 = vmatpush1.xpose.msra.mxu0 0.0
    %157 = vmatprep.subr.mxu0 0.0
    %158 = vmatpush1.xpose.msra.mxu0 0.0
    %159 = vmatprep.subr.mxu0 0.0
    %160 = vmatpush1.xpose.msra.mxu0 0.0
    %161 = vmatprep.subr.mxu0 0.0
    %162 = vmatpush1.xpose.msra.mxu0 0.0
    %163 = vmatprep.subr.mxu0 0.0
    %164 = vmatpush1.xpose.msra.mxu0 0.0
    %165 = vmatprep.subr.mxu0 0.0
    %166 = vmatpush1.xpose.msra.mxu0 0.0
    %167 = vmatprep.subr.mxu0 0.0
    %168 = vmatpush1.xpose.msra.mxu0 0.0
    %169 = vmatprep.subr.mxu0 0.0
    %170 = vmatpush1.xpose.msra.mxu0 0.0
    %171 = vmatprep.subr.mxu0 0.0
    %172 = vmatpush1.xpose.msra.mxu0 0.0
    %173 = vmatprep.subr.mxu0 0.0
    %174 = vmatpush1.xpose.msra.mxu0 0.0
    %175 = vmatprep.subr.mxu0 0.0
    %176 = vmatpush1.xpose.msra.mxu0 0.0
    %177 = vmatprep.subr.mxu0 0.0
    %178 = vmatpush1.xpose.msra.mxu0 0.0
    %179 = vmatprep.subr.mxu0 0.0
    %180 = vmatpush1.xpose.msra.mxu0 0.0
    %181 = vmatprep.subr.mxu0 0.0
    %182 = vmatpush1.xpose.msra.mxu0 0.0
    %183 = vmatprep.subr.mxu0 0.0
    %184 = vmatpush1.xpose.msra.mxu0 0.0
    %185 = vmatprep.subr.mxu0 0.0
    %186 = vmatpush1.xpose.msra.mxu0 0.0
    %187 = vmatprep.subr.mxu0 0.0
    %188 = vmatpush1.xpose.msra.mxu0 0.0
    %189 = vmatprep.subr.mxu0 0.0
    %190 = vmatpush1.xpose.msra.mxu0 0.0
    %191 = vmatprep.subr.mxu0 0.0
    %192 = vmatpush1.xpose.msra.mxu0 0.0
    %193 = vmatprep.subr.mxu0 0.0
    %194 = vmatpush1.xpose.msra.mxu0 0.0
    %195 = vmatprep.subr.mxu0 0.0
    %196 = vmatpush1.xpose.msra.mxu0 0.0
    %197 = vmatprep.subr.mxu0 0.0
    %198 = vmatpush1.xpose.msra.mxu0 0.0
    %199 = vmatprep.subr.mxu0 0.0
    %200 = vmatpush1.xpose.msra.mxu0 0.0
    %201 = vmatprep.subr.mxu0 0.0
    %202 = vmatpush1.xpose.msra.mxu0 0.0
    %203 = vmatprep.subr.mxu0 0.0
    %204 = vmatpush1.xpose.msra.mxu0 0.0
    %205 = vmatprep.subr.mxu0 0.0
    %206 = vmatpush1.xpose.msra.mxu0 0.0
    %207 = vmatprep.mubr.f32.mxu0 0.0
    %v208 = vand.u32 %v57, 4294901760
    %209 = vmatmul.mubr.f32.gmra.mrb[0].mxu0 %v208
    %v210 = vpop.f32.mrb[0].mxu0
    %v211 = vadd.f32 %v135, %v210
    %v212 = vpop.f32.mrb[0].mxu0
    %213 = vdwg.mxu0
    %214 = vmatprep.subr.mxu0 0.0
    %v215 = vand.u32 %v60, 4294901760
    %v216 = vsub.f32 %v60, %v215
    %217 = vmatpush1.xpose.msra.mxu0 %v216
    %218 = vmatprep.subr.mxu0 0.0
    %219 = vmatpush1.xpose.msra.mxu0 0.0
    %220 = vmatprep.subr.mxu0 0.0
    %221 = vmatpush1.xpose.msra.mxu0 0.0
    %222 = vmatprep.subr.mxu0 0.0
    %223 = vmatpush1.xpose.msra.mxu0 0.0
    %224 = vmatprep.subr.mxu0 0.0
    %225 = vmatpush1.xpose.msra.mxu0 0.0
    %226 = vmatprep.subr.mxu0 0.0
    %227 = vmatpush1.xpose.msra.mxu0 0.0
    %228 = vmatprep.subr.mxu0 0.0
    %229 = vmatpush1.xpose.msra.mxu0 0.0
    %230 = vmatprep.subr.mxu0 0.0
    %231 = vmatpush1.xpose.msra.mxu0 0.0
    %232 = vmatprep.subr.mxu0 0.0
    %233 = vmatpush1.xpose.msra.mxu0 0.0
    %234 = vmatprep.subr.mxu0 0.0
    %235 = vmatpush1.xpose.msra.mxu0 0.0
    %236 = vmatprep.subr.mxu0 0.0
    %237 = vmatpush1.xpose.msra.mxu0 0.0
    %238 = vmatprep.subr.mxu0 0.0
    %239 = vmatpush1.xpose.msra.mxu0 0.0
    %240 = vmatprep.subr.mxu0 0.0
    %241 = vmatpush1.xpose.msra.mxu0 0.0
    %242 = vmatprep.subr.mxu0 0.0
    %243 = vmatpush1.xpose.msra.mxu0 0.0
    %244 = vmatprep.subr.mxu0 0.0
    %245 = vmatpush1.xpose.msra.mxu0 0.0
    %246 = vmatprep.subr.mxu0 0.0
    %247 = vmatpush1.xpose.msra.mxu0 0.0
    %248 = vmatprep.subr.mxu0 0.0
    %249 = vmatpush1.xpose.msra.mxu0 0.0
    %250 = vmatprep.subr.mxu0 0.0
    %251 = vmatpush1.xpose.msra.mxu0 0.0
    %252 = vmatprep.subr.mxu0 0.0
    %253 = vmatpush1.xpose.msra.mxu0 0.0
    %254 = vmatprep.subr.mxu0 0.0
    %255 = vmatpush1.xpose.msra.mxu0 0.0
    %256 = vmatprep.subr.mxu0 0.0
    %257 = vmatpush1.xpose.msra.mxu0 0.0
    %258 = vmatprep.subr.mxu0 0.0
    %259 = vmatpush1.xpose.msra.mxu0 0.0
    %260 = vmatprep.subr.mxu0 0.0
    %261 = vmatpush1.xpose.msra.mxu0 0.0
    %262 = vmatprep.subr.mxu0 0.0
    %263 = vmatpush1.xpose.msra.mxu0 0.0
    %264 = vmatprep.subr.mxu0 0.0
    %265 = vmatpush1.xpose.msra.mxu0 0.0
    %266 = vmatprep.subr.mxu0 0.0
    %267 = vmatpush1.xpose.msra.mxu0 0.0
    %268 = vmatprep.subr.mxu0 0.0
    %269 = vmatpush1.xpose.msra.mxu0 0.0
    %270 = vmatprep.subr.mxu0 0.0
    %271 = vmatpush1.xpose.msra.mxu0 0.0
    %272 = vmatprep.subr.mxu0 0.0
    %273 = vmatpush1.xpose.msra.mxu0 0.0
    %274 = vmatprep.subr.mxu0 0.0
    %275 = vmatpush1.xpose.msra.mxu0 0.0
    %276 = vmatprep.subr.mxu0 0.0
    %277 = vmatpush1.xpose.msra.mxu0 0.0
    %278 = vmatprep.subr.mxu0 0.0
    %279 = vmatpush1.xpose.msra.mxu0 0.0
    %280 = vmatprep.mubr.f32.mxu0 0.0
    %v281 = vand.u32 %v57, 4294901760
    %v282 = vsub.f32 %v57, %v281
    %283 = vmatmul.mubr.f32.gmra.mrb[0].mxu0 %v282
    %v284 = vpop.f32.mrb[0].mxu0
    %v285 = vadd.f32 %v211, %v284
    %v286 = vpop.f32.mrb[0].mxu0
    %287 = vdwg.mxu0
    %288 = vmatprep.subr.mxu0 0.0
    %v289 = vand.u32 %v60, 4294901760
    %290 = vmatpush1.xpose.msra.mxu0 %v289
    %291 = vmatprep.subr.mxu0 0.0
    %292 = vmatpush1.xpose.msra.mxu0 0.0
    %293 = vmatprep.subr.mxu0 0.0
    %294 = vmatpush1.xpose.msra.mxu0 0.0
    %295 = vmatprep.subr.mxu0 0.0
    %296 = vmatpush1.xpose.msra.mxu0 0.0
    %297 = vmatprep.subr.mxu0 0.0
    %298 = vmatpush1.xpose.msra.mxu0 0.0
    %299 = vmatprep.subr.mxu0 0.0
    %300 = vmatpush1.xpose.msra.mxu0 0.0
    %301 = vmatprep.subr.mxu0 0.0
    %302 = vmatpush1.xpose.msra.mxu0 0.0
    %303 = vmatprep.subr.mxu0 0.0
    %304 = vmatpush1.xpose.msra.mxu0 0.0
    %305 = vmatprep.subr.mxu0 0.0
    %306 = vmatpush1.xpose.msra.mxu0 0.0
    %307 = vmatprep.subr.mxu0 0.0
    %308 = vmatpush1.xpose.msra.mxu0 0.0
    %309 = vmatprep.subr.mxu0 0.0
    %310 = vmatpush1.xpose.msra.mxu0 0.0
    %311 = vmatprep.subr.mxu0 0.0
    %312 = vmatpush1.xpose.msra.mxu0 0.0
    %313 = vmatprep.subr.mxu0 0.0
    %314 = vmatpush1.xpose.msra.mxu0 0.0
    %315 = vmatprep.subr.mxu0 0.0
    %316 = vmatpush1.xpose.msra.mxu0 0.0
    %317 = vmatprep.subr.mxu0 0.0
    %318 = vmatpush1.xpose.msra.mxu0 0.0
    %319 = vmatprep.subr.mxu0 0.0
    %320 = vmatpush1.xpose.msra.mxu0 0.0
    %321 = vmatprep.subr.mxu0 0.0
    %322 = vmatpush1.xpose.msra.mxu0 0.0
    %323 = vmatprep.subr.mxu0 0.0
    %324 = vmatpush1.xpose.msra.mxu0 0.0
    %325 = vmatprep.subr.mxu0 0.0
    %326 = vmatpush1.xpose.msra.mxu0 0.0
    %327 = vmatprep.subr.mxu0 0.0
    %328 = vmatpush1.xpose.msra.mxu0 0.0
    %329 = vmatprep.subr.mxu0 0.0
    %330 = vmatpush1.xpose.msra.mxu0 0.0
    %331 = vmatprep.subr.mxu0 0.0
    %332 = vmatpush1.xpose.msra.mxu0 0.0
    %333 = vmatprep.subr.mxu0 0.0
    %334 = vmatpush1.xpose.msra.mxu0 0.0
    %335 = vmatprep.subr.mxu0 0.0
    %336 = vmatpush1.xpose.msra.mxu0 0.0
    %337 = vmatprep.subr.mxu0 0.0
    %338 = vmatpush1.xpose.msra.mxu0 0.0
    %339 = vmatprep.subr.mxu0 0.0
    %340 = vmatpush1.xpose.msra.mxu0 0.0
    %341 = vmatprep.subr.mxu0 0.0
    %342 = vmatpush1.xpose.msra.mxu0 0.0
    %343 = vmatprep.subr.mxu0 0.0
    %344 = vmatpush1.xpose.msra.mxu0 0.0
    %345 = vmatprep.subr.mxu0 0.0
    %346 = vmatpush1.xpose.msra.mxu0 0.0
    %347 = vmatprep.subr.mxu0 0.0
    %348 = vmatpush1.xpose.msra.mxu0 0.0
    %349 = vmatprep.subr.mxu0 0.0
    %350 = vmatpush1.xpose.msra.mxu0 0.0
    %351 = vmatprep.subr.mxu0 0.0
    %352 = vmatpush1.xpose.msra.mxu0 0.0
    %353 = vmatprep.mubr.f32.mxu0 0.0
    %v354 = vand.u32 %v57, 4294901760
    %v355 = vsub.f32 %v57, %v354
    %v356 = vand.u32 %v355, 4294901760
    %357 = vmatmul.mubr.f32.gmra.mrb[0].mxu0 %v356
    %v358 = vpop.f32.mrb[0].mxu0
    %v359 = vadd.f32 %v285, %v358
    %v360 = vpop.f32.mrb[0].mxu0
    %361 = vdwg.mxu0
    %362 = vmatprep.subr.mxu0 0.0
    %v363 = vand.u32 %v60, 4294901760
    %v364 = vsub.f32 %v60, %v363
    %v365 = vand.u32 %v364, 4294901760
    %366 = vmatpush1.xpose.msra.mxu0 %v365
    %367 = vmatprep.subr.mxu0 0.0
    %368 = vmatpush1.xpose.msra.mxu0 0.0
    %369 = vmatprep.subr.mxu0 0.0
    %370 = vmatpush1.xpose.msra.mxu0 0.0
    %371 = vmatprep.subr.mxu0 0.0
    %372 = vmatpush1.xpose.msra.mxu0 0.0
    %373 = vmatprep.subr.mxu0 0.0
    %374 = vmatpush1.xpose.msra.mxu0 0.0
    %375 = vmatprep.subr.mxu0 0.0
    %376 = vmatpush1.xpose.msra.mxu0 0.0
    %377 = vmatprep.subr.mxu0 0.0
    %378 = vmatpush1.xpose.msra.mxu0 0.0
    %379 = vmatprep.subr.mxu0 0.0
    %380 = vmatpush1.xpose.msra.mxu0 0.0
    %381 = vmatprep.subr.mxu0 0.0
    %382 = vmatpush1.xpose.msra.mxu0 0.0
    %383 = vmatprep.subr.mxu0 0.0
    %384 = vmatpush1.xpose.msra.mxu0 0.0
    %385 = vmatprep.subr.mxu0 0.0
    %386 = vmatpush1.xpose.msra.mxu0 0.0
    %387 = vmatprep.subr.mxu0 0.0
    %388 = vmatpush1.xpose.msra.mxu0 0.0
    %389 = vmatprep.subr.mxu0 0.0
    %390 = vmatpush1.xpose.msra.mxu0 0.0
    %391 = vmatprep.subr.mxu0 0.0
    %392 = vmatpush1.xpose.msra.mxu0 0.0
    %393 = vmatprep.subr.mxu0 0.0
    %394 = vmatpush1.xpose.msra.mxu0 0.0
    %395 = vmatprep.subr.mxu0 0.0
    %396 = vmatpush1.xpose.msra.mxu0 0.0
    %397 = vmatprep.subr.mxu0 0.0
    %398 = vmatpush1.xpose.msra.mxu0 0.0
    %399 = vmatprep.subr.mxu0 0.0
    %400 = vmatpush1.xpose.msra.mxu0 0.0
    %401 = vmatprep.subr.mxu0 0.0
    %402 = vmatpush1.xpose.msra.mxu0 0.0
    %403 = vmatprep.subr.mxu0 0.0
    %404 = vmatpush1.xpose.msra.mxu0 0.0
    %405 = vmatprep.subr.mxu0 0.0
    %406 = vmatpush1.xpose.msra.mxu0 0.0
    %407 = vmatprep.subr.mxu0 0.0
    %408 = vmatpush1.xpose.msra.mxu0 0.0
    %409 = vmatprep.subr.mxu0 0.0
    %410 = vmatpush1.xpose.msra.mxu0 0.0
    %411 = vmatprep.subr.mxu0 0.0
    %412 = vmatpush1.xpose.msra.mxu0 0.0
    %413 = vmatprep.subr.mxu0 0.0
    %414 = vmatpush1.xpose.msra.mxu0 0.0
    %415 = vmatprep.subr.mxu0 0.0
    %416 = vmatpush1.xpose.msra.mxu0 0.0
    %417 = vmatprep.subr.mxu0 0.0
    %418 = vmatpush1.xpose.msra.mxu0 0.0
    %419 = vmatprep.subr.mxu0 0.0
    %420 = vmatpush1.xpose.msra.mxu0 0.0
    %421 = vmatprep.subr.mxu0 0.0
    %422 = vmatpush1.xpose.msra.mxu0 0.0
    %423 = vmatprep.subr.mxu0 0.0
    %424 = vmatpush1.xpose.msra.mxu0 0.0
    %425 = vmatprep.subr.mxu0 0.0
    %426 = vmatpush1.xpose.msra.mxu0 0.0
    %427 = vmatprep.subr.mxu0 0.0
    %428 = vmatpush1.xpose.msra.mxu0 0.0
    %429 = vmatprep.mubr.f32.mxu0 0.0
    %v430 = vand.u32 %v57, 4294901760
    %431 = vmatmul.mubr.f32.gmra.mrb[0].mxu0 %v430
    %v432 = vpop.f32.mrb[0].mxu0
    %v433 = vadd.f32 %v359, %v432
    %v434 = vpop.f32.mrb[0].mxu0
    %435 = vdwg.mxu0
    %436 = vmatprep.subr.mxu0 0.0
    %v437 = vand.u32 %v60, 4294901760
    %438 = vmatpush1.xpose.msra.mxu0 %v437
    %439 = vmatprep.subr.mxu0 0.0
    %440 = vmatpush1.xpose.msra.mxu0 0.0
    %441 = vmatprep.subr.mxu0 0.0
    %442 = vmatpush1.xpose.msra.mxu0 0.0
    %443 = vmatprep.subr.mxu0 0.0
    %444 = vmatpush1.xpose.msra.mxu0 0.0
    %445 = vmatprep.subr.mxu0 0.0
    %446 = vmatpush1.xpose.msra.mxu0 0.0
    %447 = vmatprep.subr.mxu0 0.0
    %448 = vmatpush1.xpose.msra.mxu0 0.0
    %449 = vmatprep.subr.mxu0 0.0
    %450 = vmatpush1.xpose.msra.mxu0 0.0
    %451 = vmatprep.subr.mxu0 0.0
    %452 = vmatpush1.xpose.msra.mxu0 0.0
    %453 = vmatprep.subr.mxu0 0.0
    %454 = vmatpush1.xpose.msra.mxu0 0.0
    %455 = vmatprep.subr.mxu0 0.0
    %456 = vmatpush1.xpose.msra.mxu0 0.0
    %457 = vmatprep.subr.mxu0 0.0
    %458 = vmatpush1.xpose.msra.mxu0 0.0
    %459 = vmatprep.subr.mxu0 0.0
    %460 = vmatpush1.xpose.msra.mxu0 0.0
    %461 = vmatprep.subr.mxu0 0.0
    %462 = vmatpush1.xpose.msra.mxu0 0.0
    %463 = vmatprep.subr.mxu0 0.0
    %464 = vmatpush1.xpose.msra.mxu0 0.0
    %465 = vmatprep.subr.mxu0 0.0
    %466 = vmatpush1.xpose.msra.mxu0 0.0
    %467 = vmatprep.subr.mxu0 0.0
    %468 = vmatpush1.xpose.msra.mxu0 0.0
    %469 = vmatprep.subr.mxu0 0.0
    %470 = vmatpush1.xpose.msra.mxu0 0.0
    %471 = vmatprep.subr.mxu0 0.0
    %472 = vmatpush1.xpose.msra.mxu0 0.0
    %473 = vmatprep.subr.mxu0 0.0
    %474 = vmatpush1.xpose.msra.mxu0 0.0
    %475 = vmatprep.subr.mxu0 0.0
    %476 = vmatpush1.xpose.msra.mxu0 0.0
    %477 = vmatprep.subr.mxu0 0.0
    %478 = vmatpush1.xpose.msra.mxu0 0.0
    %479 = vmatprep.subr.mxu0 0.0
    %480 = vmatpush1.xpose.msra.mxu0 0.0
    %481 = vmatprep.subr.mxu0 0.0
    %482 = vmatpush1.xpose.msra.mxu0 0.0
    %483 = vmatprep.subr.mxu0 0.0
    %484 = vmatpush1.xpose.msra.mxu0 0.0
    %485 = vmatprep.subr.mxu0 0.0
    %486 = vmatpush1.xpose.msra.mxu0 0.0
    %487 = vmatprep.subr.mxu0 0.0
    %488 = vmatpush1.xpose.msra.mxu0 0.0
    %489 = vmatprep.subr.mxu0 0.0
    %490 = vmatpush1.xpose.msra.mxu0 0.0
    %491 = vmatprep.subr.mxu0 0.0
    %492 = vmatpush1.xpose.msra.mxu0 0.0
    %493 = vmatprep.subr.mxu0 0.0
    %494 = vmatpush1.xpose.msra.mxu0 0.0
    %495 = vmatprep.subr.mxu0 0.0
    %496 = vmatpush1.xpose.msra.mxu0 0.0
    %497 = vmatprep.subr.mxu0 0.0
    %498 = vmatpush1.xpose.msra.mxu0 0.0
    %499 = vmatprep.subr.mxu0 0.0
    %500 = vmatpush1.xpose.msra.mxu0 0.0
    %501 = vmatprep.mubr.f32.mxu0 0.0
    %v502 = vand.u32 %v57, 4294901760
    %503 = vmatmul.mubr.f32.gmra.mrb[0].mxu0 %v502
    %v504 = vpop.f32.mrb[0].mxu0
    %v505 = vadd.f32 %v433, %v504
    %v506 = vpop.f32.mrb[0].mxu0
    %507 = vdwg.mxu0
    %vm508 = vcmask 64512
    %v509 = vsel %vm508, %v505, -inf
    %510 = vmax.xlane.f32.xlu0 %v509
    %v511 = vpop.xlane.xlu0 %510
    %v512 = vsub.f32 %v505, %v511
    %v513 = vmul.f32 %v512, 1.442695
    %v514 = vpow.pop %v513
    %v515 = vsel %vm508, %v514, 0.0
    %516 = vadd.xlane.f32.xlu0 %v515
    %v517 = vpop.xlane.xlu0 %516
    %v518 = vrcp.pop %v517
    %v519 = vmul.f32 %v514, %v518
    %520 = vst.msk [vmem:[#allocation9] sm:$0xff] %vm508, %v519
    %v521 = vld [vmem:[#allocation7] sm:$0xff]
    %v523 = vsel %vm508, %v519, 0
    %525 = vmatprep.subr.mxu0 0.0
    %v526 = vand.u32 %v521, 4294901760
    %527 = vmatpush1.msra.mxu0 %v526
    %528 = vmatprep.subr.mxu0 0.0
    %529 = vmatpush1.msra.mxu0 0.0
    %530 = vmatprep.subr.mxu0 0.0
    %531 = vmatpush1.msra.mxu0 0.0
    %532 = vmatprep.subr.mxu0 0.0
    %533 = vmatpush1.msra.mxu0 0.0
    %534 = vmatprep.subr.mxu0 0.0
    %535 = vmatpush1.msra.mxu0 0.0
    %536 = vmatprep.subr.mxu0 0.0
    %537 = vmatpush1.msra.mxu0 0.0
    %538 = vmatprep.subr.mxu0 0.0
    %539 = vmatpush1.msra.mxu0 0.0
    %540 = vmatprep.subr.mxu0 0.0
    %541 = vmatpush1.msra.mxu0 0.0
    %542 = vmatprep.subr.mxu0 0.0
    %543 = vmatpush1.msra.mxu0 0.0
    %544 = vmatprep.subr.mxu0 0.0
    %545 = vmatpush1.msra.mxu0 0.0
    %546 = vmatprep.subr.mxu0 0.0
    %547 = vmatpush1.msra.mxu0 0.0
    %548 = vmatprep.subr.mxu0 0.0
    %549 = vmatpush1.msra.mxu0 0.0
    %550 = vmatprep.subr.mxu0 0.0
    %551 = vmatpush1.msra.mxu0 0.0
    %552 = vmatprep.subr.mxu0 0.0
    %553 = vmatpush1.msra.mxu0 0.0
    %554 = vmatprep.subr.mxu0 0.0
    %555 = vmatpush1.msra.mxu0 0.0
    %556 = vmatprep.subr.mxu0 0.0
    %557 = vmatpush1.msra.mxu0 0.0
    %558 = vmatprep.subr.mxu0 0.0
    %559 = vmatpush1.msra.mxu0 0.0
    %560 = vmatprep.subr.mxu0 0.0
    %561 = vmatpush1.msra.mxu0 0.0
    %562 = vmatprep.subr.mxu0 0.0
    %563 = vmatpush1.msra.mxu0 0.0
    %564 = vmatprep.subr.mxu0 0.0
    %565 = vmatpush1.msra.mxu0 0.0
    %566 = vmatprep.subr.mxu0 0.0
    %567 = vmatpush1.msra.mxu0 0.0
    %568 = vmatprep.subr.mxu0 0.0
    %569 = vmatpush1.msra.mxu0 0.0
    %570 = vmatprep.subr.mxu0 0.0
    %571 = vmatpush1.msra.mxu0 0.0
    %572 = vmatprep.subr.mxu0 0.0
    %573 = vmatpush1.msra.mxu0 0.0
    %574 = vmatprep.subr.mxu0 0.0
    %575 = vmatpush1.msra.mxu0 0.0
    %576 = vmatprep.subr.mxu0 0.0
    %577 = vmatpush1.msra.mxu0 0.0
    %578 = vmatprep.subr.mxu0 0.0
    %579 = vmatpush1.msra.mxu0 0.0
    %580 = vmatprep.subr.mxu0 0.0
    %581 = vmatpush1.msra.mxu0 0.0
    %582 = vmatprep.subr.mxu0 0.0
    %583 = vmatpush1.msra.mxu0 0.0
    %584 = vmatprep.subr.mxu0 0.0
    %585 = vmatpush1.msra.mxu0 0.0
    %586 = vmatprep.subr.mxu0 0.0
    %587 = vmatpush1.msra.mxu0 0.0
    %588 = vmatprep.subr.mxu0 0.0
    %589 = vmatpush1.msra.mxu0 0.0
    %590 = vmatprep.mubr.f32.mxu0 0.0
    %v591 = vand.u32 %v523, 4294901760
    %v592 = vsub.f32 %v523, %v591
    %v593 = vand.u32 %v592, 4294901760
    %v594 = vsub.f32 %v592, %v593
    %v595 = vand.u32 %v594, 4294901760
    %596 = vmatmul.mubr.f32.gmra.mrb[0].mxu0 %v595
    %v597 = vpop.f32.mrb[0].mxu0
    %v598 = vadd.f32 0.0, %v597
    %v599 = vpop.f32.mrb[0].mxu0
    %600 = vdwg.mxu0
    %601 = vmatprep.subr.mxu0 0.0
    %v602 = vand.u32 %v521, 4294901760
    %v603 = vsub.f32 %v521, %v602
    %v604 = vand.u32 %v603, 4294901760
    %v605 = vsub.f32 %v603, %v604
    %v606 = vand.u32 %v605, 4294901760
    %607 = vmatpush1.msra.mxu0 %v606
    %608 = vmatprep.subr.mxu0 0.0
    %609 = vmatpush1.msra.mxu0 0.0
    %610 = vmatprep.subr.mxu0 0.0
    %611 = vmatpush1.msra.mxu0 0.0
    %612 = vmatprep.subr.mxu0 0.0
    %613 = vmatpush1.msra.mxu0 0.0
    %614 = vmatprep.subr.mxu0 0.0
    %615 = vmatpush1.msra.mxu0 0.0
    %616 = vmatprep.subr.mxu0 0.0
    %617 = vmatpush1.msra.mxu0 0.0
    %618 = vmatprep.subr.mxu0 0.0
    %619 = vmatpush1.msra.mxu0 0.0
    %620 = vmatprep.subr.mxu0 0.0
    %621 = vmatpush1.msra.mxu0 0.0
    %622 = vmatprep.subr.mxu0 0.0
    %623 = vmatpush1.msra.mxu0 0.0
    %624 = vmatprep.subr.mxu0 0.0
    %625 = vmatpush1.msra.mxu0 0.0
    %626 = vmatprep.subr.mxu0 0.0
    %627 = vmatpush1.msra.mxu0 0.0
    %628 = vmatprep.subr.mxu0 0.0
    %629 = vmatpush1.msra.mxu0 0.0
    %630 = vmatprep.subr.mxu0 0.0
    %631 = vmatpush1.msra.mxu0 0.0
    %632 = vmatprep.subr.mxu0 0.0
    %633 = vmatpush1.msra.mxu0 0.0
    %634 = vmatprep.subr.mxu0 0.0
    %635 = vmatpush1.msra.mxu0 0.0
    %636 = vmatprep.subr.mxu0 0.0
    %637 = vmatpush1.msra.mxu0 0.0
    %638 = vmatprep.subr.mxu0 0.0
    %639 = vmatpush1.msra.mxu0 0.0
    %640 = vmatprep.subr.mxu0 0.0
    %641 = vmatpush1.msra.mxu0 0.0
    %642 = vmatprep.subr.mxu0 0.0
    %643 = vmatpush1.msra.mxu0 0.0
    %644 = vmatprep.subr.mxu0 0.0
    %645 = vmatpush1.msra.mxu0 0.0
    %646 = vmatprep.subr.mxu0 0.0
    %647 = vmatpush1.msra.mxu0 0.0
    %648 = vmatprep.subr.mxu0 0.0
    %649 = vmatpush1.msra.mxu0 0.0
    %650 = vmatprep.subr.mxu0 0.0
    %651 = vmatpush1.msra.mxu0 0.0
    %652 = vmatprep.subr.mxu0 0.0
    %653 = vmatpush1.msra.mxu0 0.0
    %654 = vmatprep.subr.mxu0 0.0
    %655 = vmatpush1.msra.mxu0 0.0
    %656 = vmatprep.subr.mxu0 0.0
    %657 = vmatpush1.msra.mxu0 0.0
    %658 = vmatprep.subr.mxu0 0.0
    %659 = vmatpush1.msra.mxu0 0.0
    %660 = vmatprep.subr.mxu0 0.0
    %661 = vmatpush1.msra.mxu0 0.0
    %662 = vmatprep.subr.mxu0 0.0
    %663 = vmatpush1.msra.mxu0 0.0
    %664 = vmatprep.subr.mxu0 0.0
    %665 = vmatpush1.msra.mxu0 0.0
    %666 = vmatprep.subr.mxu0 0.0
    %667 = vmatpush1.msra.mxu0 0.0
    %668 = vmatprep.subr.mxu0 0.0
    %669 = vmatpush1.msra.mxu0 0.0
    %670 = vmatprep.mubr.f32.mxu0 0.0
    %v671 = vand.u32 %v523, 4294901760
    %672 = vmatmul.mubr.f32.gmra.mrb[0].mxu0 %v671
    %v673 = vpop.f32.mrb[0].mxu0
    %v674 = vadd.f32 %v598, %v673
    %v675 = vpop.f32.mrb[0].mxu0
    %676 = vdwg.mxu0
    %677 = vmatprep.subr.mxu0 0.0
    %v678 = vand.u32 %v521, 4294901760
    %v679 = vsub.f32 %v521, %v678
    %680 = vmatpush1.msra.mxu0 %v679
    %681 = vmatprep.subr.mxu0 0.0
    %682 = vmatpush1.msra.mxu0 0.0
    %683 = vmatprep.subr.mxu0 0.0
    %684 = vmatpush1.msra.mxu0 0.0
    %685 = vmatprep.subr.mxu0 0.0
    %686 = vmatpush1.msra.mxu0 0.0
    %687 = vmatprep.subr.mxu0 0.0
    %688 = vmatpush1.msra.mxu0 0.0
    %689 = vmatprep.subr.mxu0 0.0
    %690 = vmatpush1.msra.mxu0 0.0
    %691 = vmatprep.subr.mxu0 0.0
    %692 = vmatpush1.msra.mxu0 0.0
    %693 = vmatprep.subr.mxu0 0.0
    %694 = vmatpush1.msra.mxu0 0.0
    %695 = vmatprep.subr.mxu0 0.0
    %696 = vmatpush1.msra.mxu0 0.0
    %697 = vmatprep.subr.mxu0 0.0
    %698 = vmatpush1.msra.mxu0 0.0
    %699 = vmatprep.subr.mxu0 0.0
    %700 = vmatpush1.msra.mxu0 0.0
    %701 = vmatprep.subr.mxu0 0.0
    %702 = vmatpush1.msra.mxu0 0.0
    %703 = vmatprep.subr.mxu0 0.0
    %704 = vmatpush1.msra.mxu0 0.0
    %705 = vmatprep.subr.mxu0 0.0
    %706 = vmatpush1.msra.mxu0 0.0
    %707 = vmatprep.subr.mxu0 0.0
    %708 = vmatpush1.msra.mxu0 0.0
    %709 = vmatprep.subr.mxu0 0.0
    %710 = vmatpush1.msra.mxu0 0.0
    %711 = vmatprep.subr.mxu0 0.0
    %712 = vmatpush1.msra.mxu0 0.0
    %713 = vmatprep.subr.mxu0 0.0
    %714 = vmatpush1.msra.mxu0 0.0
    %715 = vmatprep.subr.mxu0 0.0
    %716 = vmatpush1.msra.mxu0 0.0
    %717 = vmatprep.subr.mxu0 0.0
    %718 = vmatpush1.msra.mxu0 0.0
    %719 = vmatprep.subr.mxu0 0.0
    %720 = vmatpush1.msra.mxu0 0.0
    %721 = vmatprep.subr.mxu0 0.0
    %722 = vmatpush1.msra.mxu0 0.0
    %723 = vmatprep.subr.mxu0 0.0
    %724 = vmatpush1.msra.mxu0 0.0
    %725 = vmatprep.subr.mxu0 0.0
    %726 = vmatpush1.msra.mxu0 0.0
    %727 = vmatprep.subr.mxu0 0.0
    %728 = vmatpush1.msra.mxu0 0.0
    %729 = vmatprep.subr.mxu0 0.0
    %730 = vmatpush1.msra.mxu0 0.0
    %731 = vmatprep.subr.mxu0 0.0
    %732 = vmatpush1.msra.mxu0 0.0
    %733 = vmatprep.subr.mxu0 0.0
    %734 = vmatpush1.msra.mxu0 0.0
    %735 = vmatprep.subr.mxu0 0.0
    %736 = vmatpush1.msra.mxu0 0.0
    %737 = vmatprep.subr.mxu0 0.0
    %738 = vmatpush1.msra.mxu0 0.0
    %739 = vmatprep.subr.mxu0 0.0
    %740 = vmatpush1.msra.mxu0 0.0
    %741 = vmatprep.subr.mxu0 0.0
    %742 = vmatpush1.msra.mxu0 0.0
    %743 = vmatprep.mubr.f32.mxu0 0.0
    %v744 = vand.u32 %v523, 4294901760
    %v745 = vsub.f32 %v523, %v744
    %746 = vmatmul.mubr.f32.gmra.mrb[0].mxu0 %v745
    %v747 = vpop.f32.mrb[0].mxu0
    %v748 = vadd.f32 %v674, %v747
    %v749 = vpop.f32.mrb[0].mxu0
    %750 = vdwg.mxu0
    %751 = vmatprep.subr.mxu0 0.0
    %v752 = vand.u32 %v521, 4294901760
    %753 = vmatpush1.msra.mxu0 %v752
    %754 = vmatprep.subr.mxu0 0.0
    %755 = vmatpush1.msra.mxu0 0.0
    %756 = vmatprep.subr.mxu0 0.0
    %757 = vmatpush1.msra.mxu0 0.0
    %758 = vmatprep.subr.mxu0 0.0
    %759 = vmatpush1.msra.mxu0 0.0
    %760 = vmatprep.subr.mxu0 0.0
    %761 = vmatpush1.msra.mxu0 0.0
    %762 = vmatprep.subr.mxu0 0.0
    %763 = vmatpush1.msra.mxu0 0.0
    %764 = vmatprep.subr.mxu0 0.0
    %765 = vmatpush1.msra.mxu0 0.0
    %766 = vmatprep.subr.mxu0 0.0
    %767 = vmatpush1.msra.mxu0 0.0
    %768 = vmatprep.subr.mxu0 0.0
    %769 = vmatpush1.msra.mxu0 0.0
    %770 = vmatprep.subr.mxu0 0.0
    %771 = vmatpush1.msra.mxu0 0.0
    %772 = vmatprep.subr.mxu0 0.0
    %773 = vmatpush1.msra.mxu0 0.0
    %774 = vmatprep.subr.mxu0 0.0
    %775 = vmatpush1.msra.mxu0 0.0
    %776 = vmatprep.subr.mxu0 0.0
    %777 = vmatpush1.msra.mxu0 0.0
    %778 = vmatprep.subr.mxu0 0.0
    %779 = vmatpush1.msra.mxu0 0.0
    %780 = vmatprep.subr.mxu0 0.0
    %781 = vmatpush1.msra.mxu0 0.0
    %782 = vmatprep.subr.mxu0 0.0
    %783 = vmatpush1.msra.mxu0 0.0
    %784 = vmatprep.subr.mxu0 0.0
    %785 = vmatpush1.msra.mxu0 0.0
    %786 = vmatprep.subr.mxu0 0.0
    %787 = vmatpush1.msra.mxu0 0.0
    %788 = vmatprep.subr.mxu0 0.0
    %789 = vmatpush1.msra.mxu0 0.0
    %790 = vmatprep.subr.mxu0 0.0
    %791 = vmatpush1.msra.mxu0 0.0
    %792 = vmatprep.subr.mxu0 0.0
    %793 = vmatpush1.msra.mxu0 0.0
    %794 = vmatprep.subr.mxu0 0.0
    %795 = vmatpush1.msra.mxu0 0.0
    %796 = vmatprep.subr.mxu0 0.0
    %797 = vmatpush1.msra.mxu0 0.0
    %798 = vmatprep.subr.mxu0 0.0
    %799 = vmatpush1.msra.mxu0 0.0
    %800 = vmatprep.subr.mxu0 0.0
    %801 = vmatpush1.msra.mxu0 0.0
    %802 = vmatprep.subr.mxu0 0.0
    %803 = vmatpush1.msra.mxu0 0.0
    %804 = vmatprep.subr.mxu0 0.0
    %805 = vmatpush1.msra.mxu0 0.0
    %806 = vmatprep.subr.mxu0 0.0
    %807 = vmatpush1.msra.mxu0 0.0
    %808 = vmatprep.subr.mxu0 0.0
    %809 = vmatpush1.msra.mxu0 0.0
    %810 = vmatprep.subr.mxu0 0.0
    %811 = vmatpush1.msra.mxu0 0.0
    %812 = vmatprep.subr.mxu0 0.0
    %813 = vmatpush1.msra.mxu0 0.0
    %814 = vmatprep.subr.mxu0 0.0
    %815 = vmatpush1.msra.mxu0 0.0
    %816 = vmatprep.mubr.f32.mxu0 0.0
    %v817 = vand.u32 %v523, 4294901760
    %v818 = vsub.f32 %v523, %v817
    %v819 = vand.u32 %v818, 4294901760
    %820 = vmatmul.mubr.f32.gmra.mrb[0].mxu0 %v819
    %v821 = vpop.f32.mrb[0].mxu0
    %v822 = vadd.f32 %v748, %v821
    %v823 = vpop.f32.mrb[0].mxu0
    %824 = vdwg.mxu0
    %825 = vmatprep.subr.mxu0 0.0
    %v826 = vand.u32 %v521, 4294901760
    %v827 = vsub.f32 %v521, %v826
    %v828 = vand.u32 %v827, 4294901760
    %829 = vmatpush1.msra.mxu0 %v828
    %830 = vmatprep.subr.mxu0 0.0
    %831 = vmatpush1.msra.mxu0 0.0
    %832 = vmatprep.subr.mxu0 0.0
    %833 = vmatpush1.msra.mxu0 0.0
    %834 = vmatprep.subr.mxu0 0.0
    %835 = vmatpush1.msra.mxu0 0.0
    %836 = vmatprep.subr.mxu0 0.0
    %837 = vmatpush1.msra.mxu0 0.0
    %838 = vmatprep.subr.mxu0 0.0
    %839 = vmatpush1.msra.mxu0 0.0
    %840 = vmatprep.subr.mxu0 0.0
    %841 = vmatpush1.msra.mxu0 0.0
    %842 = vmatprep.subr.mxu0 0.0
    %843 = vmatpush1.msra.mxu0 0.0
    %844 = vmatprep.subr.mxu0 0.0
    %845 = vmatpush1.msra.mxu0 0.0
    %846 = vmatprep.subr.mxu0 0.0
    %847 = vmatpush1.msra.mxu0 0.0
    %848 = vmatprep.subr.mxu0 0.0
    %849 = vmatpush1.msra.mxu0 0.0
    %850 = vmatprep.subr.mxu0 0.0
    %851 = vmatpush1.msra.mxu0 0.0
    %852 = vmatprep.subr.mxu0 0.0
    %853 = vmatpush1.msra.mxu0 0.0
    %854 = vmatprep.subr.mxu0 0.0
    %855 = vmatpush1.msra.mxu0 0.0
    %856 = vmatprep.subr.mxu0 0.0
    %857 = vmatpush1.msra.mxu0 0.0
    %858 = vmatprep.subr.mxu0 0.0
    %859 = vmatpush1.msra.mxu0 0.0
    %860 = vmatprep.subr.mxu0 0.0
    %861 = vmatpush1.msra.mxu0 0.0
    %862 = vmatprep.subr.mxu0 0.0
    %863 = vmatpush1.msra.mxu0 0.0
    %864 = vmatprep.subr.mxu0 0.0
    %865 = vmatpush1.msra.mxu0 0.0
    %866 = vmatprep.subr.mxu0 0.0
    %867 = vmatpush1.msra.mxu0 0.0
    %868 = vmatprep.subr.mxu0 0.0
    %869 = vmatpush1.msra.mxu0 0.0
    %870 = vmatprep.subr.mxu0 0.0
    %871 = vmatpush1.msra.mxu0 0.0
    %872 = vmatprep.subr.mxu0 0.0
    %873 = vmatpush1.msra.mxu0 0.0
    %874 = vmatprep.subr.mxu0 0.0
    %875 = vmatpush1.msra.mxu0 0.0
    %876 = vmatprep.subr.mxu0 0.0
    %877 = vmatpush1.msra.mxu0 0.0
    %878 = vmatprep.subr.mxu0 0.0
    %879 = vmatpush1.msra.mxu0 0.0
    %880 = vmatprep.subr.mxu0 0.0
    %881 = vmatpush1.msra.mxu0 0.0
    %882 = vmatprep.subr.mxu0 0.0
    %883 = vmatpush1.msra.mxu0 0.0
    %884 = vmatprep.subr.mxu0 0.0
    %885 = vmatpush1.msra.mxu0 0.0
    %886 = vmatprep.subr.mxu0 0.0
    %887 = vmatpush1.msra.mxu0 0.0
    %888 = vmatprep.subr.mxu0 0.0
    %889 = vmatpush1.msra.mxu0 0.0
    %890 = vmatprep.subr.mxu0 0.0
    %891 = vmatpush1.msra.mxu0 0.0
    %892 = vmatprep.mubr.f32.mxu0 0.0
    %v893 = vand.u32 %v523, 4294901760
    %894 = vmatmul.mubr.f32.gmra.mrb[0].mxu0 %v893
    %v895 = vpop.f32.mrb[0].mxu0
    %v896 = vadd.f32 %v822, %v895
    %v897 = vpop.f32.mrb[0].mxu0
    %898 = vdwg.mxu0
    %899 = vmatprep.subr.mxu0 0.0
    %v900 = vand.u32 %v521, 4294901760
    %901 = vmatpush1.msra.mxu0 %v900
    %902 = vmatprep.subr.mxu0 0.0
    %903 = vmatpush1.msra.mxu0 0.0
    %904 = vmatprep.subr.mxu0 0.0
    %905 = vmatpush1.msra.mxu0 0.0
    %906 = vmatprep.subr.mxu0 0.0
    %907 = vmatpush1.msra.mxu0 0.0
    %908 = vmatprep.subr.mxu0 0.0
    %909 = vmatpush1.msra.mxu0 0.0
    %910 = vmatprep.subr.mxu0 0.0
    %911 = vmatpush1.msra.mxu0 0.0
    %912 = vmatprep.subr.mxu0 0.0
    %913 = vmatpush1.msra.mxu0 0.0
    %914 = vmatprep.subr.mxu0 0.0
    %915 = vmatpush1.msra.mxu0 0.0
    %916 = vmatprep.subr.mxu0 0.0
    %917 = vmatpush1.msra.mxu0 0.0
    %918 = vmatprep.subr.mxu0 0.0
    %919 = vmatpush1.msra.mxu0 0.0
    %920 = vmatprep.subr.mxu0 0.0
    %921 = vmatpush1.msra.mxu0 0.0
    %922 = vmatprep.subr.mxu0 0.0
    %923 = vmatpush1.msra.mxu0 0.0
    %924 = vmatprep.subr.mxu0 0.0
    %925 = vmatpush1.msra.mxu0 0.0
    %926 = vmatprep.subr.mxu0 0.0
    %927 = vmatpush1.msra.mxu0 0.0
    %928 = vmatprep.subr.mxu0 0.0
    %929 = vmatpush1.msra.mxu0 0.0
    %930 = vmatprep.subr.mxu0 0.0
    %931 = vmatpush1.msra.mxu0 0.0
    %932 = vmatprep.subr.mxu0 0.0
    %933 = vmatpush1.msra.mxu0 0.0
    %934 = vmatprep.subr.mxu0 0.0
    %935 = vmatpush1.msra.mxu0 0.0
    %936 = vmatprep.subr.mxu0 0.0
    %937 = vmatpush1.msra.mxu0 0.0
    %938 = vmatprep.subr.mxu0 0.0
    %939 = vmatpush1.msra.mxu0 0.0
    %940 = vmatprep.subr.mxu0 0.0
    %941 = vmatpush1.msra.mxu0 0.0
    %942 = vmatprep.subr.mxu0 0.0
    %943 = vmatpush1.msra.mxu0 0.0
    %944 = vmatprep.subr.mxu0 0.0
    %945 = vmatpush1.msra.mxu0 0.0
    %946 = vmatprep.subr.mxu0 0.0
    %947 = vmatpush1.msra.mxu0 0.0
    %948 = vmatprep.subr.mxu0 0.0
    %949 = vmatpush1.msra.mxu0 0.0
    %950 = vmatprep.subr.mxu0 0.0
    %951 = vmatpush1.msra.mxu0 0.0
    %952 = vmatprep.subr.mxu0 0.0
    %953 = vmatpush1.msra.mxu0 0.0
    %954 = vmatprep.subr.mxu0 0.0
    %955 = vmatpush1.msra.mxu0 0.0
    %956 = vmatprep.subr.mxu0 0.0
    %957 = vmatpush1.msra.mxu0 0.0
    %958 = vmatprep.subr.mxu0 0.0
    %959 = vmatpush1.msra.mxu0 0.0
    %960 = vmatprep.subr.mxu0 0.0
    %961 = vmatpush1.msra.mxu0 0.0
    %962 = vmatprep.subr.mxu0 0.0
    %963 = vmatpush1.msra.mxu0 0.0
    %964 = vmatprep.mubr.f32.mxu0 0.0
    %v965 = vand.u32 %v523, 4294901760
    %966 = vmatmul.mubr.f32.gmra.mrb[0].mxu0 %v965
    %v967 = vpop.f32.mrb[0].mxu0
    %v968 = vadd.f32 %v896, %v967
    %v969 = vpop.f32.mrb[0].mxu0
    %970 = vdwg.mxu0
    %971 = vst.msk [vmem:[#allocation8] sm:$0xff] %vm55, %v968
    // Predicated region
    $region26: #{tpu_custom_call.1} parent=1 // pred_check
      _
    $region27: #{tpu_custom_call.1} parent=1 // pred_check_branch
      %973 = sbr.rel (0) target = $region29
    $region28: #{tpu_custom_call.1} parent=1 // pred_region
      %s975 = ssub.s32 128, 128
      %976 = vsyncadd [#allocation4], %s975
      %s978 = sshll.u32 [#allocation8], 4
      %s979 = int_to_ptr.vmem [resolvable:$true] %s978
      %981 = dma.vmem_to_hbm [thread:$0]  %s979, 128, %s3, [#allocation4]
    $region29: #{tpu_custom_call.1} parent=1 // pred_fallthru
      _
    // Predicated region
    $region30: #{tpu_custom_call.1} parent=1 // pred_check
      _
    $region31: #{tpu_custom_call.1} parent=1 // pred_check_branch
      %983 = sbr.rel (0) target = $region33
    $region32: #{tpu_custom_call.1} parent=1 // pred_region
      %s985 = ssub.s32 128, 128
      %986 = vsyncadd [#allocation10], %s985
      %s988 = sshll.u32 [#allocation9], 4
      %s989 = int_to_ptr.vmem [resolvable:$true] %s988
      %991 = dma.vmem_to_hbm [thread:$0]  %s989, 128, %s4, [#allocation10]
    $region33: #{tpu_custom_call.1} parent=1 // pred_fallthru
      _
    // Predicated region
    $region34: #{tpu_custom_call.1} parent=1 // pred_check
      _
    $region35: #{tpu_custom_call.1} parent=1 // pred_check_branch
      %993 = sbr.rel (0) target = $region37
    $region36: #{tpu_custom_call.1} parent=1 // pred_region
      %994 = dma.done [#allocation4], 128
    $region37: #{tpu_custom_call.1} parent=1 // pred_fallthru
      _
    // Predicated region
    $region38: #{tpu_custom_call.1} parent=1 // pred_check
      _
    $region39: #{tpu_custom_call.1} parent=1 // pred_check_branch
      %996 = sbr.rel (0) target = $region41
    $region40: #{tpu_custom_call.1} parent=1 // pred_region
      %997 = dma.done [#allocation10], 128
    $region41: #{tpu_custom_call.1} parent=1 // pred_fallthru
      _
    %998 = vsyncpa [#allocation3], 1
    %999 = vsyncpa [#allocation6], 1
    %1000 = vsyncpa [#allocation4], 1
    %1001 = vsyncpa [#allocation10], 1

</llo_original>
